<compile_context>
chip_gen: v7x
topology: tpu7x:2x2x1
jax: 0.10.0
libtpu: 0.0.40
codegen_flags: <defaults>
</compile_context>

<pallas_src>
import jax
import jax.numpy as jnp
from jax import lax
from jax.experimental import pallas as pl
from jax.experimental.pallas import tpu as pltpu

SUB = 8
LANE = 128
CHUNK_ROWS = 512      # sub-chunk of a block processed per loop body (vreg-friendly)
NCORES = 2            # leading "parallel" grid axis (2 TCs on v7x; loop elsewhere)


def _pick_tiling():
    """Return (max_block_rows, vmem_limit_bytes) for this TPU generation."""
    try:
        cap = int(pltpu.get_tpu_info().vmem_capacity_bytes)
    except Exception:
        cap = 64 * 1024 * 1024             # conservative fallback (v7x per-TC VMEM)
    if cap >= 100 * 1024 * 1024:            # v5e / v6e: 128 MiB per core
        return 8192, 64 * 1024 * 1024
    return 4096, 40 * 1024 * 1024           # v7x: 64 MiB per core


def _chunk_plan(block_rows):
    plan, off = [], 0
    while off < block_rows:
        sz = min(CHUNK_ROWS, block_rows - off)
        plan.append((off, sz))
        off += sz
    return tuple(plan)


def _make_kernel(block_rows, rows, steps_per_core, full_blocks, needs_mask):
    chunk_plan = _chunk_plan(block_rows)

    def accumulate(p_ref, t_ref, out_ref, limit=None):
        # Static Python loop over sub-chunks keeps intermediates small and in
        # vregs / small reusable VMEM temporaries.
        for off, sz in chunk_plan:
            x = p_ref[pl.ds(off, sz), :].astype(jnp.float32)
            t = t_ref[pl.ds(off, sz), :].astype(jnp.float32)
            # sigmoid(x) = 0.5*(tanh(x/2)+1); the affine part is reconstructed
            # in the epilogue, so only the EUP tanh + one mul stay in the loop.
            th = jnp.tanh(0.5 * x)
            if limit is not None:
                # Row-granularity validity mask; only compiled onto the
                # partial-last-block / phantom-overhang steps.  Row indices
                # stay far inside int32 range for any realistic n.
                row = off + lax.broadcasted_iota(jnp.int32, (sz, LANE), 0)
                valid = row < limit
                th = jnp.where(valid, th, 0.0)
                t = jnp.where(valid, t, 0.0)
            thr = th.reshape(sz // SUB, SUB, LANE)
            tr = t.reshape(sz // SUB, SUB, LANE)
            out_ref[0 * SUB:1 * SUB, :] += jnp.sum(thr * tr, axis=0)  # sum tanh*t
            out_ref[1 * SUB:2 * SUB, :] += jnp.sum(thr, axis=0)       # sum tanh
            out_ref[2 * SUB:3 * SUB, :] += jnp.sum(tr, axis=0)        # sum t

    def kernel(p_ref, t_ref, out_ref):
        c = pl.program_id(0)          # core / parallel axis
        i = pl.program_id(1)          # streaming step within a core

        @pl.when(i == 0)
        def _():
            out_ref[...] = jnp.zeros_like(out_ref)

        if needs_mask:
            g = c * steps_per_core + i              # global block index
            @pl.when(g < full_blocks)
            def _():
                accumulate(p_ref, t_ref, out_ref)

            @pl.when(g >= full_blocks)
            def _():
                # Partial last block or phantom step (limit may be <= 0, in
                # which case the step contributes nothing).
                accumulate(p_ref, t_ref, out_ref, limit=rows - g * block_rows)
        else:
            accumulate(p_ref, t_ref, out_ref)

    return kernel


def _dice_partial_sums(p2, t2):
    """(sum(tanh(p/2)*t), sum(tanh(p/2)), sum(t)) over a (rows,128) slab."""
    rows = p2.shape[0]
    max_block_rows, vmem_limit = _pick_tiling()
    block_rows = min(max_block_rows, (rows // SUB) * SUB)
    total_blocks = pl.cdiv(rows, block_rows)
    steps_per_core = pl.cdiv(total_blocks, NCORES)
    full_blocks = rows // block_rows
    needs_mask = (NCORES * steps_per_core * block_rows) != rows

    if NCORES * steps_per_core == total_blocks:
        def in_idx(c, i):
            return (c * steps_per_core + i, 0)
    else:
        def in_idx(c, i):
            # Clamp phantom steps onto the last real block (their data is
            # masked to zero in-kernel); keeps every DMA in bounds.
            return (jnp.minimum(c * steps_per_core + i, total_blocks - 1), 0)

    kernel = _make_kernel(block_rows, rows, steps_per_core, full_blocks,
                          needs_mask)

    in_bytes = p2.size * p2.dtype.itemsize + t2.size * t2.dtype.itemsize
    sums = pl.pallas_call(
        kernel,
        out_shape=jax.ShapeDtypeStruct((NCORES * 3 * SUB, LANE), jnp.float32),
        grid_spec=pltpu.PrefetchScalarGridSpec(
            num_scalar_prefetch=0,
            grid=(NCORES, steps_per_core),
            in_specs=[
                pl.BlockSpec((block_rows, LANE), in_idx),
                pl.BlockSpec((block_rows, LANE), in_idx),
            ],
            out_specs=pl.BlockSpec((3 * SUB, LANE), lambda c, i: (c, 0)),
        ),
        compiler_params=pltpu.CompilerParams(
            dimension_semantics=("parallel", "arbitrary"),
            vmem_limit_bytes=vmem_limit),
        cost_estimate=pl.CostEstimate(
            flops=6 * p2.size,
            transcendentals=p2.size,
            bytes_accessed=in_bytes + NCORES * 3 * SUB * LANE * 4),
    )(p2, t2)

    tot = sums.reshape(NCORES, 3, SUB, LANE).sum(axis=(0, 2, 3))
    return tot[0], tot[1], tot[2]


def adv_loss(mask_preds, mask_targets, eps=1.0):
    """Pallas equivalent of AdvLoss.forward (dice loss on sigmoid(preds))."""
    p_flat = mask_preds.reshape(-1)
    t_flat = mask_targets.reshape(-1)
    n = p_flat.shape[0]
    rows = n // LANE
    n_main = rows * LANE

    inter = jnp.float32(0.0)
    psum = jnp.float32(0.0)
    tsum = jnp.float32(0.0)
    main = 0

    if rows >= SUB:
        main = n_main
        if n_main == n:
            # Common case: free, metadata-only reshape — no pad, no copy.
            p2 = p_flat.reshape(rows, LANE)
            t2 = t_flat.reshape(rows, LANE)
        else:
            # Rare ragged case: stream the lane-aligned prefix (the prefix
            # slice is the only remaining copy); the <128-element tail is
            # added analytically below.
            p2 = p_flat[:n_main].reshape(rows, LANE)
            t2 = t_flat[:n_main].reshape(rows, LANE)
        s_tt, s_th, s_t = _dice_partial_sums(p2, t2)
        # Undo the sigmoid affine fold: sigmoid(x) = 0.5*(tanh(x/2) + 1).
        inter = 0.5 * (s_tt + s_t)
        psum = 0.5 * s_th + 0.5 * n_main
        tsum = s_t

    if main < n:
        # Ragged tail (< 128 elements) or tiny-input fallback: plain JAX.
        p_tail = jax.nn.sigmoid(p_flat[main:].astype(jnp.float32))
        t_tail = t_flat[main:].astype(jnp.float32)
        inter = inter + jnp.sum(p_tail * t_tail)
        psum = psum + jnp.sum(p_tail)
        tsum = tsum + jnp.sum(t_tail)

    dice = (inter * 2.0 + eps) / (psum + tsum + eps)
    return 1.0 - dice


if __name__ == "__main__":
    key = jax.random.PRNGKey(0)
    k1, k2 = jax.random.split(key)
    # Small shapes consistent with an image-segmentation mask head (NCHW).
    mask_preds = jax.random.normal(k1, (2, 4, 16, 16), dtype=jnp.float32)
    mask_targets = (jax.random.uniform(k2, (2, 4, 16, 16)) > 0.5).astype(
        jnp.float32)

    loss = jax.block_until_ready(adv_loss(mask_preds, mask_targets, eps=1.0))

    # Pure-JAX reference check of the forward semantics.
    p_ref = jax.nn.sigmoid(mask_preds).reshape(-1)
    t_ref = mask_targets.reshape(-1)
    inter_ref = jnp.sum(p_ref * t_ref)
    dice_ref = (inter_ref * 2.0 + 1.0) / (jnp.sum(p_ref) + jnp.sum(t_ref) + 1.0)
    loss_ref = 1.0 - dice_ref
    assert jnp.allclose(loss, loss_ref, rtol=1e-5, atol=1e-5), (loss, loss_ref)

    print("KERNEL_OK")
</pallas_src>

<mosaic_0001>
module attributes {stable_mosaic.version = 11 : i64} {
  func.func @kernel(%arg0: i32, %arg1: i32, %arg2: memref<16x128xf32, #tpu.memory_space<vmem>>, %arg3: memref<16x128xf32, #tpu.memory_space<vmem>>, %arg4: memref<24x128xf32, #tpu.memory_space<vmem>>) attributes {dimension_semantics = [#tpu.dimension_semantics<parallel>, #tpu.dimension_semantics<arbitrary>], iteration_bounds = array<i64: 2, 1>, scalar_prefetch = 0 : i64, scratch_operands = 0 : i64, tpu.core_type = #tpu.core_type<tc>, window_params = [{transform_indices = @transform_0, window_bounds = array<i64: 16, 128>}, {transform_indices = @transform_1, window_bounds = array<i64: 16, 128>}, {transform_indices = @transform_2, window_bounds = array<i64: 24, 128>}]} {
    %c0_i32 = arith.constant 0 : i32
    %0 = arith.cmpi eq, %arg1, %c0_i32 : i32
    %1 = arith.extui %0 : i1 to i32
    %c0_i32_0 = arith.constant 0 : i32
    %2 = arith.cmpi ne, %1, %c0_i32_0 : i32
    scf.if %2 {
      %cst = arith.constant 0.000000e+00 : f32
      %11 = vector.broadcast %cst : f32 to vector<24x128xf32>
      %c0 = arith.constant 0 : index
      %c0_5 = arith.constant 0 : index
      %12 = vector.load %arg4[%c0, %c0_5] : memref<24x128xf32, #tpu.memory_space<vmem>>, vector<24x128xf32>
      tpu.vector_store %arg4[%c0, %c0_5], %11 {strides = array<i32>} : memref<24x128xf32, #tpu.memory_space<vmem>>, vector<24x128xf32>,
    } else {
    }
    %c1_i32 = arith.constant 1 : i32
    %3 = arith.muli %arg0, %c1_i32 : i32
    %4 = arith.addi %3, %arg1 : i32
    %c1_i32_1 = arith.constant 1 : i32
    %5 = arith.cmpi slt, %4, %c1_i32_1 : i32
    %6 = arith.extui %5 : i1 to i32
    %c0_i32_2 = arith.constant 0 : i32
    %7 = arith.cmpi ne, %6, %c0_i32_2 : i32
    scf.if %7 {
      %c0 = arith.constant 0 : index
      %c0_5 = arith.constant 0 : index
      %11 = vector.load %arg2[%c0, %c0_5] : memref<16x128xf32, #tpu.memory_space<vmem>>, vector<16x128xf32>
      %c0_6 = arith.constant 0 : index
      %c0_7 = arith.constant 0 : index
      %12 = vector.load %arg3[%c0_6, %c0_7] : memref<16x128xf32, #tpu.memory_space<vmem>>, vector<16x128xf32>
      %cst = arith.constant 5.000000e-01 : f32
      %13 = vector.broadcast %cst : f32 to vector<16x128xf32>
      %14 = arith.mulf %13, %11 : vector<16x128xf32>
      %15 = math.tanh %14 : vector<16x128xf32>
      %16 = vector.shape_cast %15 : vector<16x128xf32> to vector<2x8x128xf32>
      %17 = vector.shape_cast %12 : vector<16x128xf32> to vector<2x8x128xf32>
      %c0_8 = arith.constant 0 : index
      %c0_9 = arith.constant 0 : index
      %18 = vector.load %arg4[%c0_8, %c0_9] : memref<24x128xf32, #tpu.memory_space<vmem>>, vector<8x128xf32>
      %19 = arith.mulf %16, %17 : vector<2x8x128xf32>
      %cst_10 = arith.constant dense<0.000000e+00> : vector<8x128xf32>
      %20 = vector.multi_reduction <add>, %19, %cst_10 [0] : vector<2x8x128xf32> to vector<8x128xf32>
      %21 = arith.addf %18, %20 : vector<8x128xf32>
      %c0_11 = arith.constant 0 : index
      %c0_12 = arith.constant 0 : index
      %22 = vector.load %arg4[%c0_11, %c0_12] : memref<24x128xf32, #tpu.memory_space<vmem>>, vector<8x128xf32>
      tpu.vector_store %arg4[%c0_11, %c0_12], %21 {strides = array<i32>} : memref<24x128xf32, #tpu.memory_space<vmem>>, vector<8x128xf32>,
      %c8 = arith.constant 8 : index
      %c0_13 = arith.constant 0 : index
      %23 = vector.load %arg4[%c8, %c0_13] : memref<24x128xf32, #tpu.memory_space<vmem>>, vector<8x128xf32>
      %cst_14 = arith.constant dense<0.000000e+00> : vector<8x128xf32>
      %24 = vector.multi_reduction <add>, %16, %cst_14 [0] : vector<2x8x128xf32> to vector<8x128xf32>
      %25 = arith.addf %23, %24 : vector<8x128xf32>
      %c8_15 = arith.constant 8 : index
      %c0_16 = arith.constant 0 : index
      %26 = vector.load %arg4[%c8_15, %c0_16] : memref<24x128xf32, #tpu.memory_space<vmem>>, vector<8x128xf32>
      tpu.vector_store %arg4[%c8_15, %c0_16], %25 {strides = array<i32>} : memref<24x128xf32, #tpu.memory_space<vmem>>, vector<8x128xf32>,
      %c16 = arith.constant 16 : index
      %c0_17 = arith.constant 0 : index
      %27 = vector.load %arg4[%c16, %c0_17] : memref<24x128xf32, #tpu.memory_space<vmem>>, vector<8x128xf32>
      %cst_18 = arith.constant dense<0.000000e+00> : vector<8x128xf32>
      %28 = vector.multi_reduction <add>, %17, %cst_18 [0] : vector<2x8x128xf32> to vector<8x128xf32>
      %29 = arith.addf %27, %28 : vector<8x128xf32>
      %c16_19 = arith.constant 16 : index
      %c0_20 = arith.constant 0 : index
      %30 = vector.load %arg4[%c16_19, %c0_20] : memref<24x128xf32, #tpu.memory_space<vmem>>, vector<8x128xf32>
      tpu.vector_store %arg4[%c16_19, %c0_20], %29 {strides = array<i32>} : memref<24x128xf32, #tpu.memory_space<vmem>>, vector<8x128xf32>,
    } else {
    }
    %c1_i32_3 = arith.constant 1 : i32
    %8 = arith.cmpi sge, %4, %c1_i32_3 : i32
    %9 = arith.extui %8 : i1 to i32
    %c0_i32_4 = arith.constant 0 : i32
    %10 = arith.cmpi ne, %9, %c0_i32_4 : i32
    scf.if %10 {
      %c16_i32 = arith.constant 16 : i32
      %11 = arith.muli %4, %c16_i32 : i32
      %c16_i32_5 = arith.constant 16 : i32
      %12 = arith.subi %c16_i32_5, %11 : i32
      %c0 = arith.constant 0 : index
      %c0_6 = arith.constant 0 : index
      %13 = vector.load %arg2[%c0, %c0_6] : memref<16x128xf32, #tpu.memory_space<vmem>>, vector<16x128xf32>
      %c0_7 = arith.constant 0 : index
      %c0_8 = arith.constant 0 : index
      %14 = vector.load %arg3[%c0_7, %c0_8] : memref<16x128xf32, #tpu.memory_space<vmem>>, vector<16x128xf32>
      %cst = arith.constant 5.000000e-01 : f32
      %15 = vector.broadcast %cst : f32 to vector<16x128xf32>
      %16 = arith.mulf %15, %13 : vector<16x128xf32>
      %17 = math.tanh %16 : vector<16x128xf32>
      %18 = tpu.iota {dimensions = array<i32: 0>} : vector<16x128xi32>
      %c0_i32_9 = arith.constant 0 : i32
      %19 = vector.broadcast %c0_i32_9 : i32 to vector<16x128xi32>
      %20 = arith.addi %19, %18 : vector<16x128xi32>
      %21 = vector.broadcast %12 : i32 to vector<16x128xi32>
      %22 = arith.cmpi slt, %20, %21 : vector<16x128xi32>
      %cst_10 = arith.constant 0.000000e+00 : f32
      %23 = vector.broadcast %cst_10 : f32 to vector<16x128xf32>
      %24 = arith.select %22, %17, %23 : vector<16x128xi1>, vector<16x128xf32>
      %cst_11 = arith.constant 0.000000e+00 : f32
      %25 = vector.broadcast %cst_11 : f32 to vector<16x128xf32>
      %26 = arith.select %22, %14, %25 : vector<16x128xi1>, vector<16x128xf32>
      %27 = vector.shape_cast %24 : vector<16x128xf32> to vector<2x8x128xf32>
      %28 = vector.shape_cast %26 : vector<16x128xf32> to vector<2x8x128xf32>
      %c0_12 = arith.constant 0 : index
      %c0_13 = arith.constant 0 : index
      %29 = vector.load %arg4[%c0_12, %c0_13] : memref<24x128xf32, #tpu.memory_space<vmem>>, vector<8x128xf32>
      %30 = arith.mulf %27, %28 : vector<2x8x128xf32>
      %cst_14 = arith.constant dense<0.000000e+00> : vector<8x128xf32>
      %31 = vector.multi_reduction <add>, %30, %cst_14 [0] : vector<2x8x128xf32> to vector<8x128xf32>
      %32 = arith.addf %29, %31 : vector<8x128xf32>
      %c0_15 = arith.constant 0 : index
      %c0_16 = arith.constant 0 : index
      %33 = vector.load %arg4[%c0_15, %c0_16] : memref<24x128xf32, #tpu.memory_space<vmem>>, vector<8x128xf32>
      tpu.vector_store %arg4[%c0_15, %c0_16], %32 {strides = array<i32>} : memref<24x128xf32, #tpu.memory_space<vmem>>, vector<8x128xf32>,
      %c8 = arith.constant 8 : index
      %c0_17 = arith.constant 0 : index
      %34 = vector.load %arg4[%c8, %c0_17] : memref<24x128xf32, #tpu.memory_space<vmem>>, vector<8x128xf32>
      %cst_18 = arith.constant dense<0.000000e+00> : vector<8x128xf32>
      %35 = vector.multi_reduction <add>, %27, %cst_18 [0] : vector<2x8x128xf32> to vector<8x128xf32>
      %36 = arith.addf %34, %35 : vector<8x128xf32>
      %c8_19 = arith.constant 8 : index
      %c0_20 = arith.constant 0 : index
      %37 = vector.load %arg4[%c8_19, %c0_20] : memref<24x128xf32, #tpu.memory_space<vmem>>, vector<8x128xf32>
      tpu.vector_store %arg4[%c8_19, %c0_20], %36 {strides = array<i32>} : memref<24x128xf32, #tpu.memory_space<vmem>>, vector<8x128xf32>,
      %c16 = arith.constant 16 : index
      %c0_21 = arith.constant 0 : index
      %38 = vector.load %arg4[%c16, %c0_21] : memref<24x128xf32, #tpu.memory_space<vmem>>, vector<8x128xf32>
      %cst_22 = arith.constant dense<0.000000e+00> : vector<8x128xf32>
      %39 = vector.multi_reduction <add>, %28, %cst_22 [0] : vector<2x8x128xf32> to vector<8x128xf32>
      %40 = arith.addf %38, %39 : vector<8x128xf32>
      %c16_23 = arith.constant 16 : index
      %c0_24 = arith.constant 0 : index
      %41 = vector.load %arg4[%c16_23, %c0_24] : memref<24x128xf32, #tpu.memory_space<vmem>>, vector<8x128xf32>
      tpu.vector_store %arg4[%c16_23, %c0_24], %40 {strides = array<i32>} : memref<24x128xf32, #tpu.memory_space<vmem>>, vector<8x128xf32>,
    } else {
    }
    return
  }
  func.func @transform_0(%arg0: i32, %arg1: i32) -> (i32, i32) {
    %c1_i32 = arith.constant 1 : i32
    %0 = arith.muli %arg0, %c1_i32 : i32
    %1 = arith.addi %0, %arg1 : i32
    %c0_i32 = arith.constant 0 : i32
    %2 = arith.minsi %1, %c0_i32 : i32
    %c0_i32_0 = arith.constant 0 : i32
    %c0_i32_1 = arith.constant 0 : i32
    return %2, %c0_i32_0 : i32, i32
  }
  func.func @transform_1(%arg0: i32, %arg1: i32) -> (i32, i32) {
    %c1_i32 = arith.constant 1 : i32
    %0 = arith.muli %arg0, %c1_i32 : i32
    %1 = arith.addi %0, %arg1 : i32
    %c0_i32 = arith.constant 0 : i32
    %2 = arith.minsi %1, %c0_i32 : i32
    %c0_i32_0 = arith.constant 0 : i32
    %c0_i32_1 = arith.constant 0 : i32
    return %2, %c0_i32_0 : i32, i32
  }
  func.func @transform_2(%arg0: i32, %arg1: i32) -> (i32, i32) {
    %c0_i32 = arith.constant 0 : i32
    %c0_i32_0 = arith.constant 0 : i32
    return %arg0, %c0_i32 : i32, i32
  }
}

</mosaic_0001>

<llo_original>
// kernel: tpu_custom_call.1
$region0: #{tpu_custom_call.1}
  #allocation0 [shape = 'u32[]', space=smem, size = 0x4, offset = 0x4, fixed_abs, tag = 'smem constant byte address 0x4 - core index']
  #allocation1 [shape = 'u32[144,128]{1,0:T(1,128)}', space=vmem, size = 0x12000, scoped, tag = 'internal scratch']
  %s0 = inlined_call_operand.hbm [shape: f32[16,128], index: 0, kind: input, shape index: {}]
  %s1 = inlined_call_operand.hbm [shape: f32[16,128], index: 1, kind: input, shape index: {}]
  %s2 = inlined_call_operand.hbm [shape: f32[48,128], index: 2, kind: output, shape index: {}]
  %s3 = sld [smem:[#allocation0]]
  $region61: #{tpu_custom_call.1} parent=0
    _
  %s5 = ssub.s32 1, %s3
  %s6 = scalar_select 0, %s5, %s3
  $region1: #{tpu_custom_call.1} parent=0
    #allocation2 [shape = 'u8[16384]{0}', space=vmem, size = 0x4000, scoped, tag = 'input window, operand 0']
    #allocation3 [shape = 's32[2]{0}', space=sflag, size = 0x8, scoped, tag = 'scoped memory for tpu_custom_call.1']
    #allocation4 [shape = 's32[2]{0}', space=sflag, size = 0x8, scoped, tag = 'scoped memory for tpu_custom_call.1']
    #allocation5 [shape = 'u8[16384]{0}', space=vmem, size = 0x4000, scoped, tag = 'input window, operand 1']
    #allocation6 [shape = 's32[2]{0}', space=sflag, size = 0x8, scoped, tag = 'scoped memory for tpu_custom_call.1']
    #allocation7 [shape = 'u8[24576]{0}', space=vmem, size = 0x6000, scoped, tag = 'output window, operand 0']
    %7 = vsyncpa [#allocation3], 0
    %s8 = scalar_lea.sflag [#allocation3], 1
    %9 = vsyncpa %s8, 0
    %10 = vsyncpa [#allocation6], 0
    %s11 = scalar_lea.sflag [#allocation6], 1
    %12 = vsyncpa %s11, 0
    %13 = vsyncpa [#allocation4], 0
    %s14 = scalar_lea.sflag [#allocation4], 1
    %15 = vsyncpa %s14, 0
    loop: start=0, step=1, limit=4
    $region2: #{tpu_custom_call.1} parent=1 // loop_pre_header
      _
    $region3: #{tpu_custom_call.1} parent=1 // loop_header
      %s17 = sphi 0, %s21
      %p18 = scmp.ge.s32.totalorder %s17, 4
      %s24 = sphi 0, %s36
      %s25 = sphi 0, %s32
      %s26 = sphi 0, %s24
      %s27 = sphi 0, %s25
      %s28 = sphi 0, %s26
      %s29 = sphi 0, %s27
      %s45 = sphi 0, %s47
      %s48 = sphi 0, %s45
      %s49 = sphi 0, %s48
      %s65 = sphi 0, %s49
      %s77 = sphi 0, %s79
      %s80 = sphi 0, %s77
      %s81 = sphi 0, %s80
      %s97 = sphi 0, %s81
      %s103 = sphi 0, %s105
      %s106 = sphi 0, %s103
      %s107 = sphi 0, %s106
      %s123 = sphi 0, %s107
    $region4: #{tpu_custom_call.1} parent=1 // loop_header_branch
      %20 = sbr.rel (%p18) target = $region8
    $region5: #{tpu_custom_call.1} parent=1 // loop_body
      %s22 = ssub.s32 %s17, 1
      %s23 = ssub.s32 %s17, 2
      %s30 = sadd.s32 1, %s25
      %p31 = scmp.ge.s32.totalorder %s30, 1
      %s32 = scalar_select %p31, 0, %s30
      %s33 = sadd.s32 1, %s24
      %s34 = scalar_select %p31, %s33, %s24
      %p35 = scmp.ge.s32.totalorder %s34, 2
      %s36 = scalar_select %p35, 0, %s34
      %s37 = sadd.s32 %s24, %s25
      %p38 = scmp.lt.s32.totalorder %s37, 0
      %s39 = scalar_select %p38, %s37, 0
      %s40 = sadd.s32 %s36, %s32
      %p41 = scmp.lt.s32.totalorder %s40, 0
      %s42 = scalar_select %p41, %s40, 0
      %s43 = ssub.s32 %s39, %s42
      %p44 = scmp.eq.s32.totalorder %s43, 0
      %s46 = sadd.s32 %s45, 1
      %s47 = scalar_select %p44, %s45, %s46
      %p50 = pneg %p44
      %p51 = scmp.eq.s32.totalorder %s17, 1
      %p52 = por %p50, %p51
      %p53 = scmp.ne.s32.totalorder %s45, %s48
      %p54 = scmp.eq.s32.totalorder %s17, 0
      %p55 = por %p53, %p54
      %p56 = scmp.ne.s32.totalorder %s45, %s48
      %p57 = scmp.eq.s32.totalorder %s22, 1
      %p58 = por %p56, %p57
      %p59 = scmp.ne.s32.totalorder %s48, %s49
      %p60 = scmp.eq.s32.totalorder %s22, 0
      %p61 = por %p59, %p60
      %p62 = scmp.ne.s32.totalorder %s48, %s49
      %p63 = scmp.eq.s32.totalorder %s23, 1
      %p64 = por %p62, %p63
      %p66 = scmp.ne.s32.totalorder %s49, %s65
      %p67 = scmp.eq.s32.totalorder %s23, 0
      %p68 = por %p66, %p67
      %s69 = sadd.s32 %s24, %s25
      %p70 = scmp.lt.s32.totalorder %s69, 0
      %s71 = scalar_select %p70, %s69, 0
      %s72 = sadd.s32 %s36, %s32
      %p73 = scmp.lt.s32.totalorder %s72, 0
      %s74 = scalar_select %p73, %s72, 0
      %s75 = ssub.s32 %s71, %s74
      %p76 = scmp.eq.s32.totalorder %s75, 0
      %s78 = sadd.s32 %s77, 1
      %s79 = scalar_select %p76, %s77, %s78
      %p82 = pneg %p76
      %p83 = scmp.eq.s32.totalorder %s17, 1
      %p84 = por %p82, %p83
      %p85 = scmp.ne.s32.totalorder %s77, %s80
      %p86 = scmp.eq.s32.totalorder %s17, 0
      %p87 = por %p85, %p86
      %p88 = scmp.ne.s32.totalorder %s77, %s80
      %p89 = scmp.eq.s32.totalorder %s22, 1
      %p90 = por %p88, %p89
      %p91 = scmp.ne.s32.totalorder %s80, %s81
      %p92 = scmp.eq.s32.totalorder %s22, 0
      %p93 = por %p91, %p92
      %p94 = scmp.ne.s32.totalorder %s80, %s81
      %p95 = scmp.eq.s32.totalorder %s23, 1
      %p96 = por %p94, %p95
      %p98 = scmp.ne.s32.totalorder %s81, %s97
      %p99 = scmp.eq.s32.totalorder %s23, 0
      %p100 = por %p98, %p99
      %s101 = ssub.s32 %s24, %s36
      %p102 = scmp.eq.s32.totalorder %s101, 0
      %s104 = sadd.s32 %s103, 1
      %s105 = scalar_select %p102, %s103, %s104
      %p108 = pneg %p102
      %p109 = scmp.eq.s32.totalorder %s17, 1
      %p110 = por %p108, %p109
      %p111 = scmp.ne.s32.totalorder %s103, %s106
      %p112 = scmp.eq.s32.totalorder %s17, 0
      %p113 = por %p111, %p112
      %p114 = scmp.ne.s32.totalorder %s103, %s106
      %p115 = scmp.eq.s32.totalorder %s22, 1
      %p116 = por %p114, %p115
      %p117 = scmp.ne.s32.totalorder %s106, %s107
      %p118 = scmp.eq.s32.totalorder %s22, 0
      %p119 = por %p117, %p118
      %p120 = scmp.ne.s32.totalorder %s106, %s107
      %p121 = scmp.eq.s32.totalorder %s23, 1
      %p122 = por %p120, %p121
      %p124 = scmp.ne.s32.totalorder %s107, %s123
      %p125 = scmp.eq.s32.totalorder %s23, 0
      %p126 = por %p124, %p125
      %p127 = scmp.le.s32.totalorder 1, %s17
      %p128 = scmp.lt.s32.totalorder %s17, 3
      %p129 = pnand %p127, %p128
      %p130 = pneg %p129
      // Predicated region
      $region9: #{tpu_custom_call.1} parent=5 // pred_check
        _
      $region10: #{tpu_custom_call.1} parent=5 // pred_check_branch
        %132 = sbr.rel (%p129) target = $region12
      $region11: #{tpu_custom_call.1} parent=5 // pred_region
        %s133 = ssub.s32 %s17, 1
      $region12: #{tpu_custom_call.1} parent=5 // pred_fallthru
        _
      %p134 = scmp.lt.s32.totalorder %s17, 2
      // Predicated region
      $region13: #{tpu_custom_call.1} parent=5 // pred_check
        %p135 = pneg %p134
      $region14: #{tpu_custom_call.1} parent=5 // pred_check_branch
        %137 = sbr.rel (%p135) target = $region16
      $region15: #{tpu_custom_call.1} parent=5 // pred_region
        // Predicated region
        $region17: #{tpu_custom_call.1} parent=15 // pred_check
          %p138 = pneg %p55
        $region18: #{tpu_custom_call.1} parent=15 // pred_check_branch
          %140 = sbr.rel (%p138) target = $region20
        $region19: #{tpu_custom_call.1} parent=15 // pred_region
          %s141 = sand.u32 %s45, 1
          %s142 = scalar_lea.sflag [#allocation3], %s141
          %s143 = sand.u32 %s45, 1
          %s144 = smul.addr %s143, 16
          %s145 = scalar_lea.vmem [#allocation2], %s144
          %s146 = sadd.s32 %s24, %s25
          %p147 = scmp.lt.s32.totalorder %s146, 0
          %s148 = scalar_select %p147, %s146, 0
          %s149 = smul.u32 2, %s148
          %s151 = ssub.s32 256, 256
          %152 = vsyncadd %s142, %s151
          %s153 = smul.addr %s149, 128
          %s154 = scalar_lea.hbm %s0, %s153
          %s155 = sshll.u32 %s145, 4
          %s156 = int_to_ptr.vmem [resolvable:$true] %s155
          %161 = dma.hbm_to_vmem [thread:$0]  %s154, 256, %s156, %s142, 128, 128, 8
        $region20: #{tpu_custom_call.1} parent=15 // pred_fallthru
          _
        // Predicated region
        $region21: #{tpu_custom_call.1} parent=15 // pred_check
          %p162 = pneg %p87
        $region22: #{tpu_custom_call.1} parent=15 // pred_check_branch
          %164 = sbr.rel (%p162) target = $region24
        $region23: #{tpu_custom_call.1} parent=15 // pred_region
          %s165 = sand.u32 %s77, 1
          %s166 = scalar_lea.sflag [#allocation6], %s165
          %s167 = sand.u32 %s77, 1
          %s168 = smul.addr %s167, 16
          %s169 = scalar_lea.vmem [#allocation5], %s168
          %s170 = sadd.s32 %s24, %s25
          %p171 = scmp.lt.s32.totalorder %s170, 0
          %s172 = scalar_select %p171, %s170, 0
          %s173 = smul.u32 2, %s172
          %s175 = ssub.s32 256, 256
          %176 = vsyncadd %s166, %s175
          %s177 = smul.addr %s173, 128
          %s178 = scalar_lea.hbm %s1, %s177
          %s179 = sshll.u32 %s169, 4
          %s180 = int_to_ptr.vmem [resolvable:$true] %s179
          %185 = dma.hbm_to_vmem [thread:$0]  %s178, 256, %s180, %s166, 128, 128, 8
        $region24: #{tpu_custom_call.1} parent=15 // pred_fallthru
          _
      $region16: #{tpu_custom_call.1} parent=5 // pred_fallthru
        _
      %p186 = scmp.le.s32.totalorder 1, %s17
      %p187 = scmp.lt.s32.totalorder %s17, 3
      %p188 = pnand %p186, %p187
      %p189 = pneg %p188
      // Predicated region
      $region25: #{tpu_custom_call.1} parent=5 // pred_check
        _
      $region26: #{tpu_custom_call.1} parent=5 // pred_check_branch
        %191 = sbr.rel (%p188) target = $region28
      $region27: #{tpu_custom_call.1} parent=5 // pred_region
        %s192 = ssub.s32 %s17, 1
        %s193 = sand.u32 %s48, 1
        %s194 = scalar_lea.sflag [#allocation3], %s193
        %s195 = sand.u32 %s48, 1
        %s196 = smul.addr %s195, 16
        %s197 = scalar_lea.vmem [#allocation2], %s196
        // Predicated region
        $region29: #{tpu_custom_call.1} parent=27 // pred_check
          %p198 = pneg %p61
        $region30: #{tpu_custom_call.1} parent=27 // pred_check_branch
          %200 = sbr.rel (%p198) target = $region32
        $region31: #{tpu_custom_call.1} parent=27 // pred_region
          %201 = dma.done %s194, 256
        $region32: #{tpu_custom_call.1} parent=27 // pred_fallthru
          _
        %s202 = sand.u32 %s80, 1
        %s203 = scalar_lea.sflag [#allocation6], %s202
        %s204 = sand.u32 %s80, 1
        %s205 = smul.addr %s204, 16
        %s206 = scalar_lea.vmem [#allocation5], %s205
        // Predicated region
        $region33: #{tpu_custom_call.1} parent=27 // pred_check
          %p207 = pneg %p93
        $region34: #{tpu_custom_call.1} parent=27 // pred_check_branch
          %209 = sbr.rel (%p207) target = $region36
        $region35: #{tpu_custom_call.1} parent=27 // pred_region
          %210 = dma.done %s203, 256
        $region36: #{tpu_custom_call.1} parent=27 // pred_fallthru
          _
        %s211 = sand.u32 %s48, 1
        %s212 = scalar_lea.sflag [#allocation3], %s211
        %s213 = sand.u32 %s48, 1
        %s214 = smul.addr %s213, 16
        %s215 = scalar_lea.vmem [#allocation2], %s214
        %p216 = pneg %p61
        %p217 = pneg %p58
        %s218 = sand.u32 %s80, 1
        %s219 = scalar_lea.sflag [#allocation6], %s218
        %s220 = sand.u32 %s80, 1
        %s221 = smul.addr %s220, 16
        %s222 = scalar_lea.vmem [#allocation5], %s221
        %p223 = pneg %p93
        %p224 = pneg %p90
        %p225 = pneg %p119
        %p226 = pneg %p116
        %s227 = sand.u32 %s106, 1
        %s228 = scalar_lea.sflag [#allocation4], %s227
        %s229 = sand.u32 %s106, 1
        %s230 = smul.addr %s229, 24
        %s231 = scalar_lea.vmem [#allocation7], %s230
        %s232 = sadd.s32 %s26, %s27
        %p233 = scmp.lt.s32.totalorder %s232, 0
        %s234 = scalar_select %p233, %s232, 0
        %s235 = smul.u32 2, %s234
        %s236 = sadd.s32 %s26, %s27
        %p237 = scmp.lt.s32.totalorder %s236, 0
        %s238 = scalar_select %p237, %s236, 0
        %s239 = smul.u32 2, %s238
        %s240 = smul.u32 3, %s26
        %p241 = scmp.eq.s32.totalorder %s27, 0
        // Predicated region
        $region37: #{tpu_custom_call.1} parent=27 // pred_check
          %p242 = pneg %p241
        $region38: #{tpu_custom_call.1} parent=27 // pred_check_branch
          %244 = sbr.rel (%p242) target = $region40
        $region39: #{tpu_custom_call.1} parent=27 // pred_region
          %245 = vst [vmem:[%s231] sm:$0xff] 0.0
          %246 = vst [vmem:[%s231 + $0x8] sm:$0xff] 0.0
          %247 = vst [vmem:[%s231 + $0x10] sm:$0xff] 0.0
        $region40: #{tpu_custom_call.1} parent=27 // pred_fallthru
          _
        %s248 = sadd.s32 %s26, %s27
        %p249 = scmp.lt.s32.totalorder %s248, 1
        // Predicated region
        $region41: #{tpu_custom_call.1} parent=27 // pred_check
          %p250 = pneg %p249
        $region42: #{tpu_custom_call.1} parent=27 // pred_check_branch
          %252 = sbr.rel (%p250) target = $region44
        $region43: #{tpu_custom_call.1} parent=27 // pred_region
          %v253 = vld [vmem:[%s197] sm:$0xff]
          %v254 = vld [vmem:[%s197 + $0x8] sm:$0xff]
          %v255 = vld [vmem:[%s206] sm:$0xff]
          %v256 = vld [vmem:[%s206 + $0x8] sm:$0xff]
          %v257 = vmul.f32 %v253, 0.5
          %v258 = vmul.f32 %v254, 0.5
          %v259 = vtanh.pop %v257
          %v260 = vtanh.pop %v258
          %v261 = vld [vmem:[%s231] sm:$0xff]
          %v262 = vmul.f32 %v259, %v255
          %v263 = vmul.f32 %v260, %v256
          %v264 = vadd.f32 %v262, %v263
          %v265 = vadd.f32 %v261, %v264
          %266 = vst [vmem:[%s231] sm:$0xff] %v265
          %v267 = vld [vmem:[%s231 + $0x8] sm:$0xff]
          %v268 = vadd.f32 %v259, %v260
          %v269 = vadd.f32 %v267, %v268
          %270 = vst [vmem:[%s231 + $0x8] sm:$0xff] %v269
          %v271 = vld [vmem:[%s231 + $0x10] sm:$0xff]
          %v272 = vadd.f32 %v255, %v256
          %v273 = vadd.f32 %v271, %v272
          %274 = vst [vmem:[%s231 + $0x10] sm:$0xff] %v273
        $region44: #{tpu_custom_call.1} parent=27 // pred_fallthru
          _
        %p275 = scmp.ge.s32.totalorder %s248, 1
        // Predicated region
        $region45: #{tpu_custom_call.1} parent=27 // pred_check
          %p276 = pneg %p275
        $region46: #{tpu_custom_call.1} parent=27 // pred_check_branch
          %278 = sbr.rel (%p276) target = $region48
        $region47: #{tpu_custom_call.1} parent=27 // pred_region
          %s279 = smul.u32 %s248, 16
          %s280 = ssub.s32 16, %s279
          %v281 = vld [vmem:[%s197] sm:$0xff]
          %v282 = vld [vmem:[%s197 + $0x8] sm:$0xff]
          %v283 = vld [vmem:[%s206] sm:$0xff]
          %v284 = vld [vmem:[%s206 + $0x8] sm:$0xff]
          %v285 = vmul.f32 %v281, 0.5
          %v286 = vmul.f32 %v282, 0.5
          %v287 = vtanh.pop %v285
          %v288 = vtanh.pop %v286
          %v289 = vlaneseq
          %v290 = vshrl.u32 %v289, 7
          %v291 = vadd.s32 %v290, 8
          %v292 = vstv %s280
          %vm293 = vcmp.lt.s32.totalorder %v290, %v292
          %vm294 = vcmp.lt.s32.totalorder %v291, %v292
          %v295 = vsel %vm293, %v287, 0.0
          %v296 = vsel %vm294, %v288, 0.0
          %v297 = vsel %vm293, %v283, 0.0
          %v298 = vsel %vm294, %v284, 0.0
          %v299 = vld [vmem:[%s231] sm:$0xff]
          %v300 = vmul.f32 %v295, %v297
          %v301 = vmul.f32 %v296, %v298
          %v302 = vadd.f32 %v300, %v301
          %v303 = vadd.f32 %v299, %v302
          %304 = vst [vmem:[%s231] sm:$0xff] %v303
          %v305 = vld [vmem:[%s231 + $0x8] sm:$0xff]
          %v306 = vadd.f32 %v295, %v296
          %v307 = vadd.f32 %v305, %v306
          %308 = vst [vmem:[%s231 + $0x8] sm:$0xff] %v307
          %v309 = vld [vmem:[%s231 + $0x10] sm:$0xff]
          %v310 = vadd.f32 %v297, %v298
          %v311 = vadd.f32 %v309, %v310
          %312 = vst [vmem:[%s231 + $0x10] sm:$0xff] %v311
        $region48: #{tpu_custom_call.1} parent=27 // pred_fallthru
          _
        %s313 = sand.u32 %s106, 1
        %s314 = scalar_lea.sflag [#allocation4], %s313
        %s315 = sand.u32 %s106, 1
        %s316 = smul.addr %s315, 24
        %s317 = scalar_lea.vmem [#allocation7], %s316
        // Predicated region
        $region49: #{tpu_custom_call.1} parent=27 // pred_check
          %p318 = pneg %p116
        $region50: #{tpu_custom_call.1} parent=27 // pred_check_branch
          %320 = sbr.rel (%p318) target = $region52
        $region51: #{tpu_custom_call.1} parent=27 // pred_region
          %s321 = smul.u32 3, %s26
          %s323 = ssub.s32 384, 384
          %324 = vsyncadd %s314, %s323
          %s325 = smul.addr %s321, 128
          %s326 = scalar_lea.hbm %s2, %s325
          %s327 = sshll.u32 %s317, 4
          %s328 = int_to_ptr.vmem [resolvable:$true] %s327
          %333 = dma.vmem_to_hbm [thread:$0]  %s328, 384, %s326, %s314, 128, 128, 8
        $region52: #{tpu_custom_call.1} parent=27 // pred_fallthru
          _
      $region28: #{tpu_custom_call.1} parent=5 // pred_fallthru
        _
      %p334 = scmp.le.s32.totalorder 2, %s17
      // Predicated region
      $region53: #{tpu_custom_call.1} parent=5 // pred_check
        %p335 = pneg %p334
      $region54: #{tpu_custom_call.1} parent=5 // pred_check_branch
        %337 = sbr.rel (%p335) target = $region56
      $region55: #{tpu_custom_call.1} parent=5 // pred_region
        %s338 = ssub.s32 %s17, 2
        // Predicated region
        $region57: #{tpu_custom_call.1} parent=55 // pred_check
          %p339 = pneg %p122
        $region58: #{tpu_custom_call.1} parent=55 // pred_check_branch
          %341 = sbr.rel (%p339) target = $region60
        $region59: #{tpu_custom_call.1} parent=55 // pred_region
          %s342 = sand.u32 %s107, 1
          %s343 = scalar_lea.sflag [#allocation4], %s342
          %s344 = sand.u32 %s107, 1
          %s345 = smul.addr %s344, 24
          %s346 = scalar_lea.vmem [#allocation7], %s345
          %347 = dma.done %s343, 384
        $region60: #{tpu_custom_call.1} parent=55 // pred_fallthru
          _
      $region56: #{tpu_custom_call.1} parent=5 // pred_fallthru
        _
    $region6: #{tpu_custom_call.1} parent=1 // loop_footer
      %s21 = sadd.s32 1, %s17
    $region7: #{tpu_custom_call.1} parent=1 // loop_footer_branch
      %16 = sbr.rel target = $region3
    $region8: #{tpu_custom_call.1} parent=1 // loop_exit
      _
    %348 = vsyncpa [#allocation3], 1
    %s349 = scalar_lea.sflag [#allocation3], 1
    %350 = vsyncpa %s349, 1
    %351 = vsyncpa [#allocation6], 1
    %s352 = scalar_lea.sflag [#allocation6], 1
    %353 = vsyncpa %s352, 1
    %354 = vsyncpa [#allocation4], 1
    %s355 = scalar_lea.sflag [#allocation4], 1
    %356 = vsyncpa %s355, 1

</llo_original>
